<compile_context>
chip_gen: v7x
topology: tpu7x:2x2x1
jax: 0.10.0
libtpu: 0.0.40
codegen_flags: <defaults>
</compile_context>

<pallas_src>
import jax
import jax.numpy as jnp
from jax.experimental import pallas as pl
from jax.experimental.pallas import tpu as pltpu


# ---------------------------------------------------------------------------
# Kernel
# ---------------------------------------------------------------------------
def _inverse_rotate_kernel(x_ref, wt_ref, o_ref):
    # x_ref: (TM, K) activation block; wt_ref: (K, TN) block of W^T
    # (pre-transposed & padded once at init); o_ref: (TM, TN).
    o_ref[...] = jnp.dot(
        x_ref[...], wt_ref[...], preferred_element_type=jnp.float32
    ).astype(o_ref.dtype)


# ---------------------------------------------------------------------------
# Small helpers
# ---------------------------------------------------------------------------
def _round_up(v, m):
    return ((v + m - 1) // m) * m


def _round_down(v, m):
    return (v // m) * m


def _vmem_capacity_bytes():
    """Physical VMEM of the current generation; conservative fallback = v7x."""
    try:
        cap = int(pltpu.get_tpu_info().vmem_capacity_bytes)
        if cap > 0:
            return cap
    except Exception:
        pass
    return 64 * 1024 * 1024  # v7x per-TensorCore VMEM (smallest of v5e/v6e/v7x)


def _probe_buffered():
    """Does this JAX build accept pipeline_mode=pl.Buffered(n) on BlockSpec?"""
    try:
        pl.BlockSpec((8, 128), lambda i, j: (0, 0), pipeline_mode=pl.Buffered(1))
        return True
    except Exception:
        return False


_HAS_BUFFERED = _probe_buffered()


def _pick_tm(limit, M, tm_max):
    """Largest row tile <= (limit, tm_max), MXU-friendly."""
    cap = min(tm_max, limit)
    if cap < 8:
        return 8
    m_full = _round_up(M, 8)
    if m_full <= cap:
        return m_full                      # one block covers all rows
    if cap >= 256:
        return _round_down(cap, 256)       # full 256-row MXU passes (v6e/v7x)
    return max(8, _round_down(cap, 8))


def _plan(M, n_pad, in_isz, out_isz, budget, tm_max, w_resident_bufs):
    """Returns (tm, tn, resident)."""
    m_full = _round_up(M, 8)
    tm_floor = min(256, m_full)

    # --- resident mode: whole W^T stays in VMEM (single buffer if supported) ---
    w_res = w_resident_bufs * n_pad * n_pad * in_isz
    stream_per_row = 2 * n_pad * (in_isz + out_isz)   # x + out, double-buffered
    if w_res + tm_floor * stream_per_row <= budget:
        tm = _pick_tm((budget - w_res) // stream_per_row, M, tm_max)
        return tm, n_pad, True

    # --- N-tiled fallback (large n): stream (n_pad, tn) column blocks of W^T ---
    tm_t = tm_floor
    denom = 2 * n_pad * in_isz + 2 * tm_t * out_isz
    tn_limit = max(budget - 2 * tm_t * n_pad * in_isz, 0) // denom
    tn = min(n_pad, max(128, _round_down(max(tn_limit, 128), 128)))
    rem = max(budget - 2 * n_pad * tn * in_isz, 0)
    tm = _pick_tm(rem // (2 * n_pad * in_isz + 2 * tn * out_isz), M, tm_max)
    # NOTE: for n so large that even (tm=8, tn=128) overflows VMEM, a K-tiled
    # accumulator variant would be needed; not required for realistic hidden sizes.
    return tm, tn, False


def _vmem_estimate(tm, tn, n_pad, in_isz, out_isz, resident, w_resident_bufs):
    w_bufs = w_resident_bufs if resident else 2
    return (w_bufs * n_pad * tn * in_isz          # W^T block(s)
            + 2 * tm * n_pad * in_isz             # x double-buffer
            + 2 * tm * tn * out_isz)              # out double-buffer


# ---------------------------------------------------------------------------
# Weight prep (hoisted out of the hot path)
# ---------------------------------------------------------------------------
def prepare_weight(weight, compute_dtype=None):
    """One-time prep of lin_layer.weight: W^T, feature dim padded to a
    multiple of 128 (exact: zero K-columns contribute 0), cast to the compute
    dtype.  Do this at init, not per forward call."""
    n = weight.shape[0]
    assert weight.shape == (n, n)
    n_pad = _round_up(n, 128)
    w_t = weight.T
    if n_pad != n:
        w_t = jnp.pad(w_t, ((0, n_pad - n), (0, n_pad - n)))
    if compute_dtype is not None and w_t.dtype != jnp.dtype(compute_dtype):
        w_t = w_t.astype(compute_dtype)
    return w_t


# ---------------------------------------------------------------------------
# Forward
# ---------------------------------------------------------------------------
def _inverse_rotate_padded(x, w_t, n, *, compute_dtype, out_dtype,
                           tm_max=1024, allow_xla_fallback=False):
    """x @ W.T given the pre-transposed, 128-padded W^T (shape (n_pad, n_pad))."""
    compute_dtype = jnp.dtype(compute_dtype)
    out_dtype = jnp.dtype(out_dtype)
    n_pad = w_t.shape[0]
    orig_shape = x.shape
    assert x.shape[-1] == n

    x2d = x.reshape(-1, n)
    M = x2d.shape[0]

    if w_t.dtype != compute_dtype:          # no-op for the prepared path
        w_t = w_t.astype(compute_dtype)

    # Tiny-problem fast path (off by default): per-call kernel overhead and
    # 128-padding inflation dominate; XLA's fused matmul wins at these sizes.
    if allow_xla_fallback and M * n_pad * n_pad <= (1 << 22):
        out = jnp.matmul(x2d.astype(compute_dtype), w_t[:n, :n]).astype(out_dtype)
        return out.reshape(orig_shape)

    if n_pad != n:
        # NOTE: padding x / slicing out costs extra HBM passes; keep hidden
        # dims a multiple of 128 (or keep the padded layout end-to-end in the
        # consumer) to avoid it.
        x2d = jnp.pad(x2d, ((0, 0), (0, n_pad - n)))
    if x2d.dtype != compute_dtype:
        x2d = x2d.astype(compute_dtype)

    in_isz = compute_dtype.itemsize
    out_isz = out_dtype.itemsize

    capacity = _vmem_capacity_bytes()
    budget = (capacity * 3) // 4            # ~96 MiB on v5e/v6e, ~48 MiB on v7x
    w_resident_bufs = 1 if _HAS_BUFFERED else 2

    tm, tn, resident = _plan(M, n_pad, in_isz, out_isz, budget, tm_max,
                             w_resident_bufs)
    grid_m = pl.cdiv(M, tm)
    grid_n = pl.cdiv(n_pad, tn)

    # Grid ordering: the inner axis is the one whose operand we are willing
    # to re-read from HBM (the cheaper of {W^T re-reads, x re-reads}).
    if resident or grid_n == 1:
        m_outer = True
    else:
        w_reread = (grid_m - 1) * n_pad * n_pad
        x_reread = (grid_n - 1) * M * n_pad
        m_outer = w_reread <= x_reread

    if m_outer:
        grid = (grid_m, grid_n)
        x_map = lambda i, j: (i, 0)
        w_map = lambda i, j: (0, j)
        o_map = lambda i, j: (i, j)
    else:
        grid = (grid_n, grid_m)
        x_map = lambda j, i: (i, 0)
        w_map = lambda j, i: (0, j)
        o_map = lambda j, i: (i, j)

    if resident and _HAS_BUFFERED:
        # Constant index map -> a single VMEM buffer is enough for W^T.
        w_spec = pl.BlockSpec((n_pad, tn), w_map, pipeline_mode=pl.Buffered(1))
    else:
        w_spec = pl.BlockSpec((n_pad, tn), w_map)

    vmem_est = _vmem_estimate(tm, tn, n_pad, in_isz, out_isz, resident,
                              w_resident_bufs)
    vmem_limit = int(min(capacity, max(vmem_est + (4 << 20), 32 << 20)))

    cost = pl.CostEstimate(
        flops=2 * M * n_pad * n_pad,
        transcendentals=0,
        bytes_accessed=(M * n_pad * in_isz          # read x
                        + n_pad * n_pad * in_isz    # read W^T
                        + M * n_pad * out_isz),     # write out
    )

    out = pl.pallas_call(
        _inverse_rotate_kernel,
        out_shape=jax.ShapeDtypeStruct((M, n_pad), out_dtype),
        grid_spec=pltpu.PrefetchScalarGridSpec(
            num_scalar_prefetch=0,
            grid=grid,
            in_specs=[
                pl.BlockSpec((tm, n_pad), x_map),   # x streams over rows
                w_spec,                             # W^T resident or N-tiled
            ],
            out_specs=pl.BlockSpec((tm, tn), o_map),
        ),
        compiler_params=pltpu.CompilerParams(
            dimension_semantics=("parallel", "parallel"),  # megacore on v7x
            vmem_limit_bytes=vmem_limit,
        ),
        cost_estimate=cost,
    )(x2d, w_t)

    if n_pad != n:
        out = out[:, :n]
    return out.reshape(orig_shape)


def inverse_rotate(x, weight, *, compute_dtype=None, out_dtype=None,
                   tm_max=1024, allow_xla_fallback=False):
    """Computes x @ weight.T.  Convenience path that re-preps the weight each
    call; for repeated forwards prefer InverseRotateLayer (preps once)."""
    cdt = jnp.dtype(compute_dtype) if compute_dtype is not None else x.dtype
    w_t = prepare_weight(weight, cdt)
    return _inverse_rotate_padded(
        x, w_t, weight.shape[0], compute_dtype=cdt,
        out_dtype=out_dtype if out_dtype is not None else x.dtype,
        tm_max=tm_max, allow_xla_fallback=allow_xla_fallback)


class InverseRotateLayer:
    """JAX/Pallas port of the PyTorch InverseRotateLayer.

    forward(x) = x @ W.T where W is the wrapped RotateLayer's orthogonal
    (n, n) weight.  The transposed / padded / cast copy of W is prepared once
    here.  For inference, compute_dtype=jnp.bfloat16 is recommended (f32
    accumulation is kept inside the kernel)."""

    def __init__(self, weight, *, compute_dtype=None, out_dtype=None,
                 tm_max=1024, allow_xla_fallback=False):
        n = weight.shape[0]
        assert weight.shape == (n, n)
        self.n = n
        self.compute_dtype = jnp.dtype(compute_dtype) if compute_dtype is not None \
            else jnp.dtype(weight.dtype)
        self.out_dtype = out_dtype
        self.tm_max = tm_max
        self.allow_xla_fallback = allow_xla_fallback
        self.w_t = prepare_weight(weight, self.compute_dtype)  # one-time prep

    def __call__(self, x):
        out_dtype = self.out_dtype if self.out_dtype is not None else x.dtype
        return _inverse_rotate_padded(
            x, self.w_t, self.n, compute_dtype=self.compute_dtype,
            out_dtype=out_dtype, tm_max=self.tm_max,
            allow_xla_fallback=self.allow_xla_fallback)


# ---------------------------------------------------------------------------
# Demo / correctness check
# ---------------------------------------------------------------------------
if __name__ == "__main__":
    key = jax.random.PRNGKey(0)
    k_x, k_w = jax.random.split(key)

    batch, seq, hidden = 2, 8, 32

    # Deterministic parameter init: RotateLayer-style orthogonal weight (n, n)
    # built via QR of a random normal matrix (synthetic, no checkpoint load).
    w_raw = jax.random.normal(k_w, (hidden, hidden), dtype=jnp.float32)
    q, _ = jnp.linalg.qr(w_raw)
    weight = q.astype(jnp.float32)  # lin_layer.weight, shape (n, n)

    x = jax.random.normal(k_x, (batch, seq, hidden), dtype=jnp.float32)

    layer = InverseRotateLayer(weight)  # weight prep hoisted out of the forward
    out = jax.block_until_ready(layer(x))

    # Correctness check against plain-JAX reference of x @ W^T.
    ref = jnp.matmul(x, weight.T)
    assert out.shape == ref.shape
    assert jnp.allclose(out, ref, atol=1e-5, rtol=1e-5)

    print("KERNEL_OK")
</pallas_src>

<mosaic_0001>
module attributes {stable_mosaic.version = 11 : i64} {
  func.func @_inverse_rotate_kernel(%arg0: i32, %arg1: i32, %arg2: memref<16x128xf32, #tpu.memory_space<vmem>>, %arg3: memref<128x128xf32, #tpu.memory_space<vmem>>, %arg4: memref<16x128xf32, #tpu.memory_space<vmem>>) attributes {dimension_semantics = [#tpu.dimension_semantics<parallel>, #tpu.dimension_semantics<parallel>], iteration_bounds = array<i64: 1, 1>, scalar_prefetch = 0 : i64, scratch_operands = 0 : i64, tpu.core_type = #tpu.core_type<tc>, window_params = [{transform_indices = @transform_0, window_bounds = array<i64: 16, 128>}, {pipeline_mode = #tpu.pipeline_mode<synchronous>, transform_indices = @transform_1, window_bounds = array<i64: 128, 128>}, {transform_indices = @transform_2, window_bounds = array<i64: 16, 128>}]} {
    %c0 = arith.constant 0 : index
    %c0_0 = arith.constant 0 : index
    %0 = vector.load %arg2[%c0, %c0_0] : memref<16x128xf32, #tpu.memory_space<vmem>>, vector<16x128xf32>
    %c0_1 = arith.constant 0 : index
    %c0_2 = arith.constant 0 : index
    %1 = vector.load %arg3[%c0_1, %c0_2] : memref<128x128xf32, #tpu.memory_space<vmem>>, vector<128x128xf32>
    %cst = arith.constant dense<0.000000e+00> : vector<16x128xf32>
    %2 = tpu.matmul %0, %1, %cst {dimension_numbers = #tpu.dot_dimension_numbers<[1], [0], [0], [1], [0, 0, 1, 1], [], []>} : vector<16x128xf32>, vector<128x128xf32>, vector<16x128xf32> -> vector<16x128xf32>
    %c0_3 = arith.constant 0 : index
    %c0_4 = arith.constant 0 : index
    %3 = vector.load %arg4[%c0_3, %c0_4] : memref<16x128xf32, #tpu.memory_space<vmem>>, vector<16x128xf32>
    tpu.vector_store %arg4[%c0_3, %c0_4], %2 {strides = array<i32>} : memref<16x128xf32, #tpu.memory_space<vmem>>, vector<16x128xf32>,
    return
  }
  func.func @transform_0(%arg0: i32, %arg1: i32) -> (i32, i32) {
    %c0_i32 = arith.constant 0 : i32
    %c0_i32_0 = arith.constant 0 : i32
    return %arg0, %c0_i32 : i32, i32
  }
  func.func @transform_1(%arg0: i32, %arg1: i32) -> (i32, i32) {
    %c0_i32 = arith.constant 0 : i32
    %c0_i32_0 = arith.constant 0 : i32
    return %c0_i32, %arg1 : i32, i32
  }
  func.func @transform_2(%arg0: i32, %arg1: i32) -> (i32, i32) {
    %c0_i32 = arith.constant 0 : i32
    return %arg0, %arg1 : i32, i32
  }
}

</mosaic_0001>

<llo_original>
// kernel: tpu_custom_call.1
$region0: #{tpu_custom_call.1}
  #allocation0 [shape = 'u32[]', space=smem, size = 0x4, offset = 0x4, fixed_abs, tag = 'smem constant byte address 0x4 - core index']
  #allocation1 [shape = 'u32[144,128]{1,0:T(1,128)}', space=vmem, size = 0x12000, scoped, tag = 'internal scratch']
  %s0 = inlined_call_operand.hbm [shape: f32[16,128], index: 0, kind: input, shape index: {}]
  %s1 = inlined_call_operand.hbm [shape: f32[128,128], index: 1, kind: input, shape index: {}]
  %s2 = inlined_call_operand.hbm [shape: f32[16,128], index: 2, kind: output, shape index: {}]
  %s3 = sld [smem:[#allocation0]]
  $region26: #{tpu_custom_call.1} parent=0
    _
  %s5 = ssub.s32 1, %s3
  %s6 = scalar_select 0, %s5, %s3
  $region1: #{tpu_custom_call.1} parent=0
    #allocation2 [shape = 'u8[8192]{0}', space=vmem, size = 0x2000, scoped, tag = 'input window, operand 0, single buffered']
    #allocation3 [shape = 's32[1]{0}', space=sflag, size = 0x4, scoped, tag = 'scoped memory for tpu_custom_call.1']
    #allocation4 [shape = 's32[1]{0}', space=sflag, size = 0x4, scoped, tag = 'scoped memory for tpu_custom_call.1']
    #allocation5 [shape = 'u8[65536]{0}', space=vmem, size = 0x10000, scoped, tag = 'input window, operand 1, single buffered']
    #allocation6 [shape = 's32[1]{0}', space=sflag, size = 0x4, scoped, tag = 'scoped memory for tpu_custom_call.1']
    #allocation7 [shape = 'u8[8192]{0}', space=vmem, size = 0x2000, scoped, tag = 'output window, operand 0, single buffered']
    %7 = vsyncpa [#allocation3], 0
    %8 = vsyncpa [#allocation6], 0
    %9 = vsyncpa [#allocation4], 0
    // Predicated region
    $region2: #{tpu_custom_call.1} parent=1 // pred_check
      _
    $region3: #{tpu_custom_call.1} parent=1 // pred_check_branch
      %11 = sbr.rel (0) target = $region5
    $region4: #{tpu_custom_call.1} parent=1 // pred_region
      %s13 = ssub.s32 256, 256
      %14 = vsyncadd [#allocation3], %s13
      %s15 = sshll.u32 [#allocation2], 4
      %s16 = int_to_ptr.vmem [resolvable:$true] %s15
      %21 = dma.hbm_to_vmem [thread:$0]  %s0, 256, %s16, [#allocation3], 128, 128, 8
    $region5: #{tpu_custom_call.1} parent=1 // pred_fallthru
      _
    // Predicated region
    $region6: #{tpu_custom_call.1} parent=1 // pred_check
      _
    $region7: #{tpu_custom_call.1} parent=1 // pred_check_branch
      %23 = sbr.rel (0) target = $region9
    $region8: #{tpu_custom_call.1} parent=1 // pred_region
      %s25 = ssub.s32 2048, 2048
      %26 = vsyncadd [#allocation6], %s25
      %s27 = sshll.u32 [#allocation5], 4
      %s28 = int_to_ptr.vmem [resolvable:$true] %s27
      %33 = dma.hbm_to_vmem [thread:$0]  %s1, 2048, %s28, [#allocation6], 128, 128, 8
    $region9: #{tpu_custom_call.1} parent=1 // pred_fallthru
      _
    // Predicated region
    $region10: #{tpu_custom_call.1} parent=1 // pred_check
      _
    $region11: #{tpu_custom_call.1} parent=1 // pred_check_branch
      %35 = sbr.rel (0) target = $region13
    $region12: #{tpu_custom_call.1} parent=1 // pred_region
      %36 = dma.done [#allocation3], 256
    $region13: #{tpu_custom_call.1} parent=1 // pred_fallthru
      _
    // Predicated region
    $region14: #{tpu_custom_call.1} parent=1 // pred_check
      _
    $region15: #{tpu_custom_call.1} parent=1 // pred_check_branch
      %38 = sbr.rel (0) target = $region17
    $region16: #{tpu_custom_call.1} parent=1 // pred_region
      %39 = dma.done [#allocation6], 2048
    $region17: #{tpu_custom_call.1} parent=1 // pred_fallthru
      _
    %v40 = vld [vmem:[#allocation2] sm:$0xff]
    %v41 = vld [vmem:[#allocation2 + $0x8] sm:$0xff]
    %v42 = vld [vmem:[#allocation5] sm:$0xff]
    %v43 = vld [vmem:[#allocation5 + $0x8] sm:$0xff]
    %v44 = vld [vmem:[#allocation5 + $0x10] sm:$0xff]
    %v45 = vld [vmem:[#allocation5 + $0x18] sm:$0xff]
    %v46 = vld [vmem:[#allocation5 + $0x20] sm:$0xff]
    %v47 = vld [vmem:[#allocation5 + $0x28] sm:$0xff]
    %v48 = vld [vmem:[#allocation5 + $0x30] sm:$0xff]
    %v49 = vld [vmem:[#allocation5 + $0x38] sm:$0xff]
    %v50 = vld [vmem:[#allocation5 + $0x40] sm:$0xff]
    %v51 = vld [vmem:[#allocation5 + $0x48] sm:$0xff]
    %v52 = vld [vmem:[#allocation5 + $0x50] sm:$0xff]
    %v53 = vld [vmem:[#allocation5 + $0x58] sm:$0xff]
    %v54 = vld [vmem:[#allocation5 + $0x60] sm:$0xff]
    %v55 = vld [vmem:[#allocation5 + $0x68] sm:$0xff]
    %v56 = vld [vmem:[#allocation5 + $0x70] sm:$0xff]
    %v57 = vld [vmem:[#allocation5 + $0x78] sm:$0xff]
    %58 = vmatprep.subr.mxu0 0.0
    %59 = vmatpush1.msra.mxu0 %v42
    %60 = vmatprep.subr.mxu0 0.0
    %61 = vmatpush1.msra.mxu0 %v43
    %62 = vmatprep.subr.mxu0 0.0
    %63 = vmatpush1.msra.mxu0 %v44
    %64 = vmatprep.subr.mxu0 0.0
    %65 = vmatpush1.msra.mxu0 %v45
    %66 = vmatprep.subr.mxu0 0.0
    %67 = vmatpush1.msra.mxu0 %v46
    %68 = vmatprep.subr.mxu0 0.0
    %69 = vmatpush1.msra.mxu0 %v47
    %70 = vmatprep.subr.mxu0 0.0
    %71 = vmatpush1.msra.mxu0 %v48
    %72 = vmatprep.subr.mxu0 0.0
    %73 = vmatpush1.msra.mxu0 %v49
    %74 = vmatprep.subr.mxu0 0.0
    %75 = vmatpush1.msra.mxu0 %v50
    %76 = vmatprep.subr.mxu0 0.0
    %77 = vmatpush1.msra.mxu0 %v51
    %78 = vmatprep.subr.mxu0 0.0
    %79 = vmatpush1.msra.mxu0 %v52
    %80 = vmatprep.subr.mxu0 0.0
    %81 = vmatpush1.msra.mxu0 %v53
    %82 = vmatprep.subr.mxu0 0.0
    %83 = vmatpush1.msra.mxu0 %v54
    %84 = vmatprep.subr.mxu0 0.0
    %85 = vmatpush1.msra.mxu0 %v55
    %86 = vmatprep.subr.mxu0 0.0
    %87 = vmatpush1.msra.mxu0 %v56
    %88 = vmatprep.subr.mxu0 0.0
    %89 = vmatpush1.msra.mxu0 %v57
    %90 = vmatprep.subr.mxu0 0.0
    %91 = vmatpush1.msra.mxu0 0.0
    %92 = vmatprep.subr.mxu0 0.0
    %93 = vmatpush1.msra.mxu0 0.0
    %94 = vmatprep.subr.mxu0 0.0
    %95 = vmatpush1.msra.mxu0 0.0
    %96 = vmatprep.subr.mxu0 0.0
    %97 = vmatpush1.msra.mxu0 0.0
    %98 = vmatprep.subr.mxu0 0.0
    %99 = vmatpush1.msra.mxu0 0.0
    %100 = vmatprep.subr.mxu0 0.0
    %101 = vmatpush1.msra.mxu0 0.0
    %102 = vmatprep.subr.mxu0 0.0
    %103 = vmatpush1.msra.mxu0 0.0
    %104 = vmatprep.subr.mxu0 0.0
    %105 = vmatpush1.msra.mxu0 0.0
    %106 = vmatprep.subr.mxu0 0.0
    %107 = vmatpush1.msra.mxu0 0.0
    %108 = vmatprep.subr.mxu0 0.0
    %109 = vmatpush1.msra.mxu0 0.0
    %110 = vmatprep.subr.mxu0 0.0
    %111 = vmatpush1.msra.mxu0 0.0
    %112 = vmatprep.subr.mxu0 0.0
    %113 = vmatpush1.msra.mxu0 0.0
    %114 = vmatprep.subr.mxu0 0.0
    %115 = vmatpush1.msra.mxu0 0.0
    %116 = vmatprep.subr.mxu0 0.0
    %117 = vmatpush1.msra.mxu0 0.0
    %118 = vmatprep.subr.mxu0 0.0
    %119 = vmatpush1.msra.mxu0 0.0
    %120 = vmatprep.subr.mxu0 0.0
    %121 = vmatpush1.msra.mxu0 0.0
    %122 = vmatprep.mubr.f32.mxu0 0.0
    %123 = vmatmul.mubr.f32.gmra.mrb[0].mxu0 %v40
    %v124 = vpop.f32.mrb[0].mxu0
    %v125 = vadd.f32 0.0, %v124
    %v126 = vpop.f32.mrb[0].mxu0
    %127 = vmatprep.mubr.f32.mxu0 0.0
    %128 = vmatmul.mubr.f32.gmra.mrb[0].mxu0 %v41
    %v129 = vpop.f32.mrb[0].mxu0
    %v130 = vadd.f32 0.0, %v129
    %v131 = vpop.f32.mrb[0].mxu0
    %132 = vdwg.mxu0
    %133 = vst [vmem:[#allocation7] sm:$0xff] %v125
    %134 = vst [vmem:[#allocation7 + $0x8] sm:$0xff] %v130
    // Predicated region
    $region18: #{tpu_custom_call.1} parent=1 // pred_check
      _
    $region19: #{tpu_custom_call.1} parent=1 // pred_check_branch
      %136 = sbr.rel (0) target = $region21
    $region20: #{tpu_custom_call.1} parent=1 // pred_region
      %s138 = ssub.s32 256, 256
      %139 = vsyncadd [#allocation4], %s138
      %s140 = sshll.u32 [#allocation7], 4
      %s141 = int_to_ptr.vmem [resolvable:$true] %s140
      %146 = dma.vmem_to_hbm [thread:$0]  %s141, 256, %s2, [#allocation4], 128, 128, 8
    $region21: #{tpu_custom_call.1} parent=1 // pred_fallthru
      _
    // Predicated region
    $region22: #{tpu_custom_call.1} parent=1 // pred_check
      _
    $region23: #{tpu_custom_call.1} parent=1 // pred_check_branch
      %148 = sbr.rel (0) target = $region25
    $region24: #{tpu_custom_call.1} parent=1 // pred_region
      %149 = dma.done [#allocation4], 256
    $region25: #{tpu_custom_call.1} parent=1 // pred_fallthru
      _
    %150 = vsyncpa [#allocation3], 1
    %151 = vsyncpa [#allocation6], 1
    %152 = vsyncpa [#allocation4], 1

</llo_original>
